<compile_context>
chip_gen: v6e
topology: v6e:2x2x1
jax: 0.10.0
libtpu: 0.0.40
codegen_flags: <defaults>
</compile_context>

<pallas_src>
import functools

import jax
import jax.numpy as jnp
from jax import lax
from jax.experimental import pallas as pl
from jax.experimental.pallas import tpu as pltpu


def _cdiv(a, b):
    return (a + b - 1) // b


def _round_up(a, b):
    return _cdiv(a, b) * b


def _vmem_capacity_bytes():
    try:
        info = pltpu.get_tpu_info()
        cap = getattr(info, "vmem_capacity_bytes", None)
        if cap:
            return int(cap)
    except Exception:
        pass
    return 64 * 1024 * 1024          # conservative (v7x-sized) fallback


def _conv1d_kernel(x_ref, halo_ref, w_ref, b_ref, o_ref, *,
                   kernel_size, stride, dilation, t_tile, halo, use_im2col):
    # x_ref    : (1, C_in, T_TILE*stride)   compute dtype, non-overlapping tile
    # halo_ref : (1, 1, C_in, halo_cols)    compute dtype, right halo of tile
    # w_ref    : (CO, K*C_in) [im2col]  or  (CO, K, C_in) [accumulate]
    # b_ref    : (CO, 1)                    f32
    # o_ref    : (1, CO, T_TILE)            out dtype
    x_main = x_ref[0]                                        # (C_in, t_blk)
    if halo > 0:
        x_full = jnp.concatenate([x_main, halo_ref[0, 0]], axis=1)
    else:
        x_full = x_main

    def tap(kk):
        start = kk * dilation
        if stride == 1:
            return x_full[:, start:start + t_tile]
        # TODO(synk): stride>1 is a value-level strided slice (lane gather); a
        # ref-level strided load or wrapper-side time de-interleave would turn
        # it into addressing/DMA work that overlaps with the MXU.
        return x_full[:, start:start + (t_tile - 1) * stride + 1:stride]

    if use_im2col:
        # Small C_in: fold the K taps into one MXU contraction of depth K*C_in.
        slab = (jnp.concatenate([tap(kk) for kk in range(kernel_size)], axis=0)
                if kernel_size > 1 else tap(0))              # (K*C_in, T_TILE)
        acc = jnp.dot(w_ref[...], slab, preferred_element_type=jnp.float32)
    else:
        # Large C_in: K accumulating matmuls, no im2col slab materialization.
        acc = jnp.dot(w_ref[:, 0, :], tap(0), preferred_element_type=jnp.float32)
        for kk in range(1, kernel_size):
            acc = acc + jnp.dot(w_ref[:, kk, :], tap(kk),
                                preferred_element_type=jnp.float32)

    o_ref[0] = (acc + b_ref[...]).astype(o_ref.dtype)        # (CO, T_TILE)


def conv_norm_forward(x, weight, bias=None, *, stride=1, padding=None, dilation=1,
                      compute_dtype=jnp.bfloat16, out_dtype=None,
                      time_tile=None, cout_tile=None):
    """Pallas forward pass equivalent to ConvNorm(...)(signal).

    x: (N, C_in, T), weight: (C_out, C_in, K), bias: (C_out,) or None.
    Returns (N, C_out, T_out) in `out_dtype` (default: x.dtype).
    `compute_dtype` controls the MXU input cast (bf16 default, f32 for exactness).
    """
    n, c_in, t = x.shape
    c_out, c_in_w, k = weight.shape
    assert c_in == c_in_w
    if padding is None:
        assert k % 2 == 1
        padding = int(dilation * (k - 1) / 2)
    if out_dtype is None:
        out_dtype = x.dtype
    if bias is None:
        bias = jnp.zeros((c_out,), jnp.float32)

    halo = dilation * (k - 1)
    t_out = (t + 2 * padding - halo - 1) // stride + 1
    assert t_out >= 1, "convolution output is empty"

    in_bytes = jnp.dtype(compute_dtype).itemsize
    out_bytes = jnp.dtype(out_dtype).itemsize

    # ---- channel padding & compute-path selection ---------------------------
    # Sublane-align C_in (16 for bf16 packing, 8 for f32) so im2col taps stack
    # on packed-vreg boundaries; the zero rows contribute nothing.
    c_in_align = 16 if in_bytes <= 2 else 8
    c_in_pad = _round_up(c_in, c_in_align)
    use_im2col = (k == 1) or (c_in_pad < 128)

    # ---- C_out tiling: keep the whole weight resident (n_co == 1) whenever it
    # fits a small VMEM budget, so x is read from HBM exactly once.
    w_bytes_full = _round_up(c_out, 8) * k * c_in_pad * in_bytes
    if cout_tile is None:
        cout_tile = c_out if w_bytes_full <= 12 * 1024 * 1024 else 256
    if c_out <= cout_tile:
        c_out_pad = _round_up(c_out, 8)      # pad to sublane multiple only
        co_tile = c_out_pad
    else:
        # Rare path (very large weights): tile C_out; x[b] is re-read n_co times.
        co_tile = cout_tile
        c_out_pad = _round_up(c_out, co_tile)
    n_co = c_out_pad // co_tile

    # ---- time tiling: derived from a per-step VMEM working-set estimate -----
    vmem_cap = _vmem_capacity_bytes()
    vmem_limit = min(vmem_cap * 3 // 4, 96 * 1024 * 1024)   # ~48 MiB v7x, 96 MiB v5e/v6e
    budget = int(vmem_limit * 0.7)
    halo_cols = max(halo, 1)

    def step_bytes(tt):
        tb = tt * stride
        sz = 2 * c_in_pad * tb * in_bytes                  # x block (double buffered)
        sz += 2 * c_in_pad * halo_cols * in_bytes          # halo block
        sz += 2 * co_tile * k * c_in_pad * in_bytes        # weight block
        sz += 2 * co_tile * tt * out_bytes                 # output block
        sz += c_in_pad * (tb + halo_cols) * in_bytes       # in-kernel x_full copy
        if use_im2col:
            sz += k * c_in_pad * tt * in_bytes             # im2col slab
        sz += co_tile * tt * 4                             # f32 accumulator
        return sz

    if time_tile is None:
        t_tile = 128
        for cand in (4096, 2048, 1024, 512, 256):
            if step_bytes(cand) <= budget:
                t_tile = cand
                break
    else:
        t_tile = max(128, _round_up(time_tile, 128))
    t_tile = min(t_tile, _round_up(t_out, 128))            # lane-dense output tiles
    # v7x shards parallel grid axes over its 2 TensorCores: keep >= 2 steps.
    while n * _cdiv(t_out, t_tile) < 2 and t_tile > 128:
        t_tile = max(128, (t_tile // 2) // 128 * 128)

    n_t = _cdiv(t_out, t_tile)
    t_out_pad = n_t * t_tile
    t_blk = t_tile * stride                                 # input cols per tile (no halo)

    # ---- operand prep --------------------------------------------------------
    # Pad time so all n_t main blocks exist and the per-tile right halo can be
    # carved from the tail with a plain slice+reshape (no gather pass over x).
    cheap_halo = halo_cols <= t_blk
    t_in = (n_t + 1) * t_blk if cheap_halo else n_t * t_blk + halo_cols
    pad_right = t_in - t - padding
    assert pad_right >= 0

    x_c = jnp.pad(x.astype(compute_dtype),
                  ((0, 0), (0, c_in_pad - c_in), (padding, pad_right)))

    if cheap_halo:
        tail = x_c[:, :, t_blk:(n_t + 1) * t_blk].reshape(n, c_in_pad, n_t, t_blk)
        x_halo = jnp.transpose(tail[:, :, :, :halo_cols], (0, 2, 1, 3))
    else:
        # TODO(synk): huge-dilation corner case (halo > time tile) falls back to
        # a gather; a de-interleaved layout would avoid it.
        starts = (jnp.arange(n_t) + 1) * t_blk
        idx = starts[:, None] + jnp.arange(halo_cols)[None, :]
        x_halo = jnp.transpose(x_c[:, :, idx], (0, 2, 1, 3))
    # x_halo: (N, n_t, C_in_pad, halo_cols)

    # Weight: (C_out, C_in, K) -> k-major, C_in minor, channel/row zero-padded.
    w3 = jnp.transpose(weight, (0, 2, 1))                   # (C_out, K, C_in)
    w3 = jnp.pad(w3, ((0, c_out_pad - c_out), (0, 0), (0, c_in_pad - c_in)))
    w3 = w3.astype(compute_dtype)
    if use_im2col:
        w_arr = w3.reshape(c_out_pad, k * c_in_pad)
        w_spec = pl.BlockSpec((co_tile, k * c_in_pad), lambda b, co, j: (co, 0))
    else:
        w_arr = w3
        w_spec = pl.BlockSpec((co_tile, k, c_in_pad), lambda b, co, j: (co, 0, 0))

    b2 = jnp.pad(bias.astype(jnp.float32), (0, c_out_pad - c_out)).reshape(c_out_pad, 1)

    kernel = functools.partial(
        _conv1d_kernel,
        kernel_size=k, stride=stride, dilation=dilation,
        t_tile=t_tile, halo=halo, use_im2col=use_im2col,
    )

    flops = 2 * n * c_out * c_in * k * t_out
    bytes_accessed = (x_c.size * in_bytes + x_halo.size * in_bytes
                      + w_arr.size * in_bytes + b2.size * 4
                      + n * c_out_pad * t_out_pad * out_bytes)

    out = pl.pallas_call(
        kernel,
        out_shape=jax.ShapeDtypeStruct((n, c_out_pad, t_out_pad), out_dtype),
        grid_spec=pltpu.PrefetchScalarGridSpec(
            num_scalar_prefetch=0,
            grid=(n, n_co, n_t),
            in_specs=[
                pl.BlockSpec((1, c_in_pad, t_blk), lambda b, co, j: (b, 0, j)),
                pl.BlockSpec((1, 1, c_in_pad, halo_cols), lambda b, co, j: (b, j, 0, 0)),
                w_spec,
                pl.BlockSpec((co_tile, 1), lambda b, co, j: (co, 0)),
            ],
            out_specs=pl.BlockSpec((1, co_tile, t_tile), lambda b, co, j: (b, co, j)),
        ),
        compiler_params=pltpu.CompilerParams(
            dimension_semantics=("parallel", "parallel", "parallel"),
            vmem_limit_bytes=vmem_limit,
        ),
        cost_estimate=pl.CostEstimate(
            flops=flops, transcendentals=0, bytes_accessed=bytes_accessed),
    )(x_c, x_halo, w_arr, b2)

    return out[:, :c_out, :t_out]


# ----------------------------- test harness ----------------------------------

def _reference_conv1d(x, weight, bias, *, stride, padding, dilation):
    out = lax.conv_general_dilated(
        x, weight,
        window_strides=(stride,),
        padding=[(padding, padding)],
        rhs_dilation=(dilation,),
        dimension_numbers=("NCH", "OIH", "NCH"),
    )
    return out + bias.reshape(1, -1, 1)


def _run_case(seed, *, n, c_in, c_out, t, k, stride=1, dilation=1, padding=None, **kw):
    if padding is None:
        padding = int(dilation * (k - 1) / 2)
    key = jax.random.PRNGKey(seed)
    xkey, wkey, bkey = jax.random.split(key, 3)

    # Deterministic Conv1d-style uniform init.
    fan_in = c_in * k
    bound = 1.0 / (fan_in ** 0.5)
    weight = jax.random.uniform(wkey, (c_out, c_in, k), jnp.float32, -bound, bound)
    bias = jax.random.uniform(bkey, (c_out,), jnp.float32, -bound, bound)
    x = jax.random.normal(xkey, (n, c_in, t), jnp.float32)

    out = conv_norm_forward(x, weight, bias, stride=stride, padding=padding,
                            dilation=dilation, **kw)
    out = jax.block_until_ready(out)

    # Tight check: same bf16-quantized operands as the kernel's MXU path
    # (both sides accumulate in f32) — isolates kernel/index-math correctness.
    xq = x.astype(jnp.bfloat16).astype(jnp.float32)
    wq = weight.astype(jnp.bfloat16).astype(jnp.float32)
    ref_q = _reference_conv1d(xq, wq, bias, stride=stride, padding=padding,
                              dilation=dilation)
    # Loose sanity check vs. the full-f32 reference (bf16 input rounding only).
    ref_f = _reference_conv1d(x, weight, bias, stride=stride, padding=padding,
                              dilation=dilation)

    assert out.shape == ref_f.shape, (out.shape, ref_f.shape)
    assert jnp.allclose(out, ref_q, atol=1e-3, rtol=1e-3), \
        float(jnp.max(jnp.abs(out - ref_q)))
    assert jnp.allclose(out, ref_f, atol=1e-1, rtol=1e-1), \
        float(jnp.max(jnp.abs(out - ref_f)))


if __name__ == "__main__":
    # ConvNorm(4, 6, kernel_size=3) -> "same" padding; small-C_in im2col path.
    _run_case(0, n=2, c_in=4, c_out=6, t=16, k=3)
    # Dilated K=5 conv spread over several time tiles (exercises the halo path).
    _run_case(1, n=2, c_in=8, c_out=6, t=300, k=5, dilation=2, time_tile=128)
    # Large-C_in path: K accumulating matmuls, no im2col slab.
    _run_case(2, n=1, c_in=128, c_out=32, t=64, k=3)
    print("KERNEL_OK")
</pallas_src>

<mosaic_0001>
module attributes {stable_mosaic.version = 11 : i64} {
  func.func @_conv1d_kernel(%arg0: i32, %arg1: i32, %arg2: i32, %arg3: memref<1x16x128xbf16, #tpu.memory_space<vmem>>, %arg4: memref<1x1x16x2xbf16, #tpu.memory_space<vmem>>, %arg5: memref<8x48xbf16, #tpu.memory_space<vmem>>, %arg6: memref<8x1xf32, #tpu.memory_space<vmem>>, %arg7: memref<1x8x128xf32, #tpu.memory_space<vmem>>) attributes {dimension_semantics = [#tpu.dimension_semantics<parallel>, #tpu.dimension_semantics<parallel>, #tpu.dimension_semantics<parallel>], iteration_bounds = array<i64: 2, 1, 1>, scalar_prefetch = 0 : i64, scratch_operands = 0 : i64, tpu.core_type = #tpu.core_type<tc>, window_params = [{transform_indices = @transform_0, window_bounds = array<i64: 1, 16, 128>}, {transform_indices = @transform_1, window_bounds = array<i64: 1, 1, 16, 2>}, {transform_indices = @transform_2, window_bounds = array<i64: 8, 48>}, {transform_indices = @transform_3, window_bounds = array<i64: 8, 1>}, {transform_indices = @transform_4, window_bounds = array<i64: 1, 8, 128>}]} {
    %c0 = arith.constant 0 : index
    %c0_0 = arith.constant 0 : index
    %c0_1 = arith.constant 0 : index
    %0 = vector.load %arg3[%c0, %c0_0, %c0_1] : memref<1x16x128xbf16, #tpu.memory_space<vmem>>, vector<1x16x128xbf16>
    %1 = vector.shape_cast %0 : vector<1x16x128xbf16> to vector<16x128xbf16>
    %c0_2 = arith.constant 0 : index
    %c0_3 = arith.constant 0 : index
    %c0_4 = arith.constant 0 : index
    %c0_5 = arith.constant 0 : index
    %2 = vector.load %arg4[%c0_2, %c0_3, %c0_4, %c0_5] : memref<1x1x16x2xbf16, #tpu.memory_space<vmem>>, vector<1x1x16x2xbf16>
    %3 = vector.shape_cast %2 : vector<1x1x16x2xbf16> to vector<16x2xbf16>
    %4 = tpu.concatenate %1, %3 in 1 : vector<16x128xbf16>, vector<16x2xbf16> -> vector<16x130xbf16>
    %5 = vector.extract_strided_slice %4 {offsets = [0, 0], sizes = [16, 128], strides = [1, 1]} : vector<16x130xbf16> to vector<16x128xbf16>
    %6 = vector.extract_strided_slice %4 {offsets = [0, 1], sizes = [16, 128], strides = [1, 1]} : vector<16x130xbf16> to vector<16x128xbf16>
    %7 = vector.extract_strided_slice %4 {offsets = [0, 2], sizes = [16, 128], strides = [1, 1]} : vector<16x130xbf16> to vector<16x128xbf16>
    %8 = tpu.concatenate %5, %6, %7 in 0 : vector<16x128xbf16>, vector<16x128xbf16>, vector<16x128xbf16> -> vector<48x128xbf16>
    %c0_6 = arith.constant 0 : index
    %c0_7 = arith.constant 0 : index
    %9 = vector.load %arg5[%c0_6, %c0_7] : memref<8x48xbf16, #tpu.memory_space<vmem>>, vector<8x48xbf16>
    %cst = arith.constant dense<0.000000e+00> : vector<8x128xf32>
    %10 = tpu.matmul %9, %8, %cst {dimension_numbers = #tpu.dot_dimension_numbers<[1], [0], [0], [1], [0, 0, 1, 1], [], []>} : vector<8x48xbf16>, vector<48x128xbf16>, vector<8x128xf32> -> vector<8x128xf32>
    %c0_8 = arith.constant 0 : index
    %c0_9 = arith.constant 0 : index
    %11 = vector.load %arg6[%c0_8, %c0_9] : memref<8x1xf32, #tpu.memory_space<vmem>>, vector<8x1xf32>
    %12 = vector.broadcast %11 : vector<8x1xf32> to vector<8x128xf32>
    %13 = arith.addf %10, %12 : vector<8x128xf32>
    %c0_10 = arith.constant 0 : index
    %c0_11 = arith.constant 0 : index
    %c0_12 = arith.constant 0 : index
    %14 = vector.load %arg7[%c0_10, %c0_11, %c0_12] : memref<1x8x128xf32, #tpu.memory_space<vmem>>, vector<1x8x128xf32>
    %15 = vector.shape_cast %14 : vector<1x8x128xf32> to vector<8x128xf32>
    %16 = vector.shape_cast %13 : vector<8x128xf32> to vector<1x8x128xf32>
    tpu.vector_store %arg7[%c0_10, %c0_11, %c0_12], %16 {strides = array<i32>} : memref<1x8x128xf32, #tpu.memory_space<vmem>>, vector<1x8x128xf32>,
    return
  }
  func.func @transform_0(%arg0: i32, %arg1: i32, %arg2: i32) -> (i32, i32, i32) {
    %c0_i32 = arith.constant 0 : i32
    %c0_i32_0 = arith.constant 0 : i32
    return %arg0, %c0_i32, %arg2 : i32, i32, i32
  }
  func.func @transform_1(%arg0: i32, %arg1: i32, %arg2: i32) -> (i32, i32, i32, i32) {
    %c0_i32 = arith.constant 0 : i32
    %c0_i32_0 = arith.constant 0 : i32
    %c0_i32_1 = arith.constant 0 : i32
    return %arg0, %arg2, %c0_i32, %c0_i32_0 : i32, i32, i32, i32
  }
  func.func @transform_2(%arg0: i32, %arg1: i32, %arg2: i32) -> (i32, i32) {
    %c0_i32 = arith.constant 0 : i32
    %c0_i32_0 = arith.constant 0 : i32
    return %arg1, %c0_i32 : i32, i32
  }
  func.func @transform_3(%arg0: i32, %arg1: i32, %arg2: i32) -> (i32, i32) {
    %c0_i32 = arith.constant 0 : i32
    %c0_i32_0 = arith.constant 0 : i32
    return %arg1, %c0_i32 : i32, i32
  }
  func.func @transform_4(%arg0: i32, %arg1: i32, %arg2: i32) -> (i32, i32, i32) {
    %c0_i32 = arith.constant 0 : i32
    return %arg0, %arg1, %arg2 : i32, i32, i32
  }
}

</mosaic_0001>

<llo_original>
// kernel: tpu_custom_call.1
$region0: #{tpu_custom_call.1}
  #allocation0 [shape = 'u32[]', space=smem, size = 0x4, offset = 0x4, fixed_abs, tag = 'smem constant byte address 0x4 - core index']
  #allocation1 [shape = 'u32[144,128]{1,0:T(1,128)}', space=vmem, size = 0x12000, scoped, tag = 'internal scratch']
  %s0 = inlined_call_operand.hbm [shape: bf16[2,16,256], index: 0, kind: input, shape index: {}]
  %s1 = inlined_call_operand.vmem [shape: bf16[2,1,16,2], index: 1, kind: input, shape index: {}]
  %s2 = inlined_call_operand.vmem [shape: bf16[8,48], index: 2, kind: input, shape index: {}]
  %s3 = inlined_call_operand.vmem [shape: f32[8,1], index: 3, kind: input, shape index: {}]
  %s4 = inlined_call_operand.hbm [shape: f32[2,8,128], index: 4, kind: output, shape index: {}]
  %s5 = sld [smem:[#allocation0]]
  $region53: #{tpu_custom_call.1} parent=0
    _
  %s7 = ssub.s32 1, %s5
  %s8 = scalar_select 0, %s7, %s5
  $region1: #{tpu_custom_call.1} parent=0
    #allocation2 [shape = 'u8[8192]{0}', space=vmem, size = 0x2000, scoped, tag = 'input window, operand 0']
    #allocation3 [shape = 's32[2]{0}', space=sflag, size = 0x8, scoped, tag = 'scoped memory for tpu_custom_call.1']
    #allocation4 [shape = 's32[2]{0}', space=sflag, size = 0x8, scoped, tag = 'scoped memory for tpu_custom_call.1']
    #allocation5 [shape = 'u8[8192]{0}', space=vmem, size = 0x2000, scoped, tag = 'output window, operand 0']
    %9 = vsyncpa [#allocation3], 0
    %s10 = scalar_lea.sflag [#allocation3], 1
    %11 = vsyncpa %s10, 0
    %12 = vsyncpa [#allocation4], 0
    %s13 = scalar_lea.sflag [#allocation4], 1
    %14 = vsyncpa %s13, 0
    loop: start=0, step=1, limit=4
    $region2: #{tpu_custom_call.1} parent=1 // loop_pre_header
      _
    $region3: #{tpu_custom_call.1} parent=1 // loop_header
      %s16 = sphi 0, %s20
      %p17 = scmp.ge.s32.totalorder %s16, 4
      %s23 = sphi 0, %s42
      %s24 = sphi 0, %s38
      %s25 = sphi 0, %s34
      %s26 = sphi 0, %s23
      %s27 = sphi 0, %s24
      %s28 = sphi 0, %s25
      %s29 = sphi 0, %s26
      %s30 = sphi 0, %s27
      %s31 = sphi 0, %s28
      %s47 = sphi 0, %s49
      %s50 = sphi 0, %s47
      %s51 = sphi 0, %s50
      %s67 = sphi 0, %s51
      %s75 = sphi 0, %s77
      %s78 = sphi 0, %s75
      %s79 = sphi 0, %s78
      %s95 = sphi 0, %s79
      %s101 = sphi 0, %s103
      %s104 = sphi 0, %s101
      %s105 = sphi 0, %s104
      %s121 = sphi 0, %s105
      %s127 = sphi 0, %s129
      %s130 = sphi 0, %s127
      %s131 = sphi 0, %s130
      %s147 = sphi 0, %s131
      %s157 = sphi 0, %s159
      %s160 = sphi 0, %s157
      %s161 = sphi 0, %s160
      %s177 = sphi 0, %s161
    $region4: #{tpu_custom_call.1} parent=1 // loop_header_branch
      %19 = sbr.rel (%p17) target = $region8
    $region5: #{tpu_custom_call.1} parent=1 // loop_body
      %s21 = ssub.s32 %s16, 1
      %s22 = ssub.s32 %s16, 2
      %s32 = sadd.s32 1, %s25
      %p33 = scmp.ge.s32.totalorder %s32, 1
      %s34 = scalar_select %p33, 0, %s32
      %s35 = sadd.s32 1, %s24
      %s36 = scalar_select %p33, %s35, %s24
      %p37 = scmp.ge.s32.totalorder %s36, 1
      %s38 = scalar_select %p37, 0, %s36
      %s39 = sadd.s32 1, %s23
      %s40 = scalar_select %p37, %s39, %s23
      %p41 = scmp.ge.s32.totalorder %s40, 2
      %s42 = scalar_select %p41, 0, %s40
      %s43 = ssub.s32 %s23, %s42
      %s44 = ssub.s32 %s25, %s34
      %s45 = sor.u32 %s43, %s44
      %p46 = scmp.eq.s32.totalorder %s45, 0
      %s48 = sadd.s32 %s47, 1
      %s49 = scalar_select %p46, %s47, %s48
      %p52 = pneg %p46
      %p53 = scmp.eq.s32.totalorder %s16, 1
      %p54 = por %p52, %p53
      %p55 = scmp.ne.s32.totalorder %s47, %s50
      %p56 = scmp.eq.s32.totalorder %s16, 0
      %p57 = por %p55, %p56
      %p58 = scmp.ne.s32.totalorder %s47, %s50
      %p59 = scmp.eq.s32.totalorder %s21, 1
      %p60 = por %p58, %p59
      %p61 = scmp.ne.s32.totalorder %s50, %s51
      %p62 = scmp.eq.s32.totalorder %s21, 0
      %p63 = por %p61, %p62
      %p64 = scmp.ne.s32.totalorder %s50, %s51
      %p65 = scmp.eq.s32.totalorder %s22, 1
      %p66 = por %p64, %p65
      %p68 = scmp.ne.s32.totalorder %s51, %s67
      %p69 = scmp.eq.s32.totalorder %s22, 0
      %p70 = por %p68, %p69
      %s71 = ssub.s32 %s23, %s42
      %s72 = ssub.s32 %s25, %s34
      %s73 = sor.u32 %s71, %s72
      %p74 = scmp.eq.s32.totalorder %s73, 0
      %s76 = sadd.s32 %s75, 1
      %s77 = scalar_select %p74, %s75, %s76
      %p80 = pneg %p74
      %p81 = scmp.eq.s32.totalorder %s16, 1
      %p82 = por %p80, %p81
      %p83 = scmp.ne.s32.totalorder %s75, %s78
      %p84 = scmp.eq.s32.totalorder %s16, 0
      %p85 = por %p83, %p84
      %p86 = scmp.ne.s32.totalorder %s75, %s78
      %p87 = scmp.eq.s32.totalorder %s21, 1
      %p88 = por %p86, %p87
      %p89 = scmp.ne.s32.totalorder %s78, %s79
      %p90 = scmp.eq.s32.totalorder %s21, 0
      %p91 = por %p89, %p90
      %p92 = scmp.ne.s32.totalorder %s78, %s79
      %p93 = scmp.eq.s32.totalorder %s22, 1
      %p94 = por %p92, %p93
      %p96 = scmp.ne.s32.totalorder %s79, %s95
      %p97 = scmp.eq.s32.totalorder %s22, 0
      %p98 = por %p96, %p97
      %s99 = ssub.s32 %s24, %s38
      %p100 = scmp.eq.s32.totalorder %s99, 0
      %s102 = sadd.s32 %s101, 1
      %s103 = scalar_select %p100, %s101, %s102
      %p106 = pneg %p100
      %p107 = scmp.eq.s32.totalorder %s16, 1
      %p108 = por %p106, %p107
      %p109 = scmp.ne.s32.totalorder %s101, %s104
      %p110 = scmp.eq.s32.totalorder %s16, 0
      %p111 = por %p109, %p110
      %p112 = scmp.ne.s32.totalorder %s101, %s104
      %p113 = scmp.eq.s32.totalorder %s21, 1
      %p114 = por %p112, %p113
      %p115 = scmp.ne.s32.totalorder %s104, %s105
      %p116 = scmp.eq.s32.totalorder %s21, 0
      %p117 = por %p115, %p116
      %p118 = scmp.ne.s32.totalorder %s104, %s105
      %p119 = scmp.eq.s32.totalorder %s22, 1
      %p120 = por %p118, %p119
      %p122 = scmp.ne.s32.totalorder %s105, %s121
      %p123 = scmp.eq.s32.totalorder %s22, 0
      %p124 = por %p122, %p123
      %s125 = ssub.s32 %s24, %s38
      %p126 = scmp.eq.s32.totalorder %s125, 0
      %s128 = sadd.s32 %s127, 1
      %s129 = scalar_select %p126, %s127, %s128
      %p132 = pneg %p126
      %p133 = scmp.eq.s32.totalorder %s16, 1
      %p134 = por %p132, %p133
      %p135 = scmp.ne.s32.totalorder %s127, %s130
      %p136 = scmp.eq.s32.totalorder %s16, 0
      %p137 = por %p135, %p136
      %p138 = scmp.ne.s32.totalorder %s127, %s130
      %p139 = scmp.eq.s32.totalorder %s21, 1
      %p140 = por %p138, %p139
      %p141 = scmp.ne.s32.totalorder %s130, %s131
      %p142 = scmp.eq.s32.totalorder %s21, 0
      %p143 = por %p141, %p142
      %p144 = scmp.ne.s32.totalorder %s130, %s131
      %p145 = scmp.eq.s32.totalorder %s22, 1
      %p146 = por %p144, %p145
      %p148 = scmp.ne.s32.totalorder %s131, %s147
      %p149 = scmp.eq.s32.totalorder %s22, 0
      %p150 = por %p148, %p149
      %s151 = ssub.s32 %s23, %s42
      %s152 = ssub.s32 %s24, %s38
      %s153 = sor.u32 %s151, %s152
      %s154 = ssub.s32 %s25, %s34
      %s155 = sor.u32 %s153, %s154
      %p156 = scmp.eq.s32.totalorder %s155, 0
      %s158 = sadd.s32 %s157, 1
      %s159 = scalar_select %p156, %s157, %s158
      %p162 = pneg %p156
      %p163 = scmp.eq.s32.totalorder %s16, 1
      %p164 = por %p162, %p163
      %p165 = scmp.ne.s32.totalorder %s157, %s160
      %p166 = scmp.eq.s32.totalorder %s16, 0
      %p167 = por %p165, %p166
      %p168 = scmp.ne.s32.totalorder %s157, %s160
      %p169 = scmp.eq.s32.totalorder %s21, 1
      %p170 = por %p168, %p169
      %p171 = scmp.ne.s32.totalorder %s160, %s161
      %p172 = scmp.eq.s32.totalorder %s21, 0
      %p173 = por %p171, %p172
      %p174 = scmp.ne.s32.totalorder %s160, %s161
      %p175 = scmp.eq.s32.totalorder %s22, 1
      %p176 = por %p174, %p175
      %p178 = scmp.ne.s32.totalorder %s161, %s177
      %p179 = scmp.eq.s32.totalorder %s22, 0
      %p180 = por %p178, %p179
      %p181 = scmp.le.s32.totalorder 1, %s16
      %p182 = scmp.lt.s32.totalorder %s16, 3
      %p183 = pnand %p181, %p182
      %p184 = pneg %p183
      // Predicated region
      $region9: #{tpu_custom_call.1} parent=5 // pred_check
        _
      $region10: #{tpu_custom_call.1} parent=5 // pred_check_branch
        %186 = sbr.rel (%p183) target = $region12
      $region11: #{tpu_custom_call.1} parent=5 // pred_region
        %s187 = ssub.s32 %s16, 1
        // Predicated region
        $region13: #{tpu_custom_call.1} parent=11 // pred_check
          %p188 = pneg %p117
        $region14: #{tpu_custom_call.1} parent=11 // pred_check_branch
          %190 = sbr.rel (%p188) target = $region16
        $region15: #{tpu_custom_call.1} parent=11 // pred_region
          %p191 = scmp.lt.s32.totalorder %s27, 0
          %s192 = scalar_select %p191, %s27, 0
          %s193 = smul.addr %s192, 4
          %s194 = scalar_lea.vmem %s2, %s193
        $region16: #{tpu_custom_call.1} parent=11 // pred_fallthru
          _
        // Predicated region
        $region17: #{tpu_custom_call.1} parent=11 // pred_check
          %p195 = pneg %p143
        $region18: #{tpu_custom_call.1} parent=11 // pred_check_branch
          %197 = sbr.rel (%p195) target = $region20
        $region19: #{tpu_custom_call.1} parent=11 // pred_region
          %p198 = scmp.lt.s32.totalorder %s27, 0
          %s199 = scalar_select %p198, %s27, 0
          %s200 = smul.addr %s199, 8
          %s201 = scalar_lea.vmem %s3, %s200
        $region20: #{tpu_custom_call.1} parent=11 // pred_fallthru
          _
      $region12: #{tpu_custom_call.1} parent=5 // pred_fallthru
        _
      %p202 = scmp.lt.s32.totalorder %s16, 2
      // Predicated region
      $region21: #{tpu_custom_call.1} parent=5 // pred_check
        %p203 = pneg %p202
      $region22: #{tpu_custom_call.1} parent=5 // pred_check_branch
        %205 = sbr.rel (%p203) target = $region24
      $region23: #{tpu_custom_call.1} parent=5 // pred_region
        // Predicated region
        $region25: #{tpu_custom_call.1} parent=23 // pred_check
          %p206 = pneg %p57
        $region26: #{tpu_custom_call.1} parent=23 // pred_check_branch
          %208 = sbr.rel (%p206) target = $region28
        $region27: #{tpu_custom_call.1} parent=23 // pred_region
          %s209 = sand.u32 %s47, 1
          %s210 = scalar_lea.sflag [#allocation3], %s209
          %s211 = sand.u32 %s47, 1
          %s212 = smul.addr %s211, 8
          %s213 = scalar_lea.vmem [#allocation2], %s212
          %s215 = ssub.s32 128, 128
          %216 = vsyncadd %s210, %s215
          %s217 = smul.addr %s23, 4
          %s218 = sadd.s32 %s25, %s217
          %s219 = smul.addr %s218, 64
          %s220 = scalar_lea.hbm %s0, %s219
          %s221 = sshll.u32 %s213, 4
          %s222 = int_to_ptr.vmem [resolvable:$true] %s221
          %227 = dma.hbm_to_vmem [thread:$0]  %s220, 128, %s222, %s210, 128, 64, 4
        $region28: #{tpu_custom_call.1} parent=23 // pred_fallthru
          _
        // Predicated region
        $region29: #{tpu_custom_call.1} parent=23 // pred_check
          %p228 = pneg %p85
        $region30: #{tpu_custom_call.1} parent=23 // pred_check_branch
          %230 = sbr.rel (%p228) target = $region32
        $region31: #{tpu_custom_call.1} parent=23 // pred_region
          %p231 = scmp.lt.s32.totalorder %s23, 1
          %s232 = scalar_select %p231, %s23, 1
          %p233 = scmp.lt.s32.totalorder %s25, 0
          %s234 = scalar_select %p233, %s25, 0
          %s235 = smul.addr %s234, 2
          %s236 = smul.addr %s232, 2
          %s237 = sadd.s32 %s235, %s236
          %s238 = smul.addr %s237, 4
          %s239 = scalar_lea.vmem %s1, %s238
        $region32: #{tpu_custom_call.1} parent=23 // pred_fallthru
          _
      $region24: #{tpu_custom_call.1} parent=5 // pred_fallthru
        _
      %p240 = scmp.le.s32.totalorder 1, %s16
      %p241 = scmp.lt.s32.totalorder %s16, 3
      %p242 = pnand %p240, %p241
      %p243 = pneg %p242
      // Predicated region
      $region33: #{tpu_custom_call.1} parent=5 // pred_check
        _
      $region34: #{tpu_custom_call.1} parent=5 // pred_check_branch
        %245 = sbr.rel (%p242) target = $region36
      $region35: #{tpu_custom_call.1} parent=5 // pred_region
        %s246 = ssub.s32 %s16, 1
        %s247 = sand.u32 %s50, 1
        %s248 = scalar_lea.sflag [#allocation3], %s247
        %s249 = sand.u32 %s50, 1
        %s250 = smul.addr %s249, 8
        %s251 = scalar_lea.vmem [#allocation2], %s250
        // Predicated region
        $region37: #{tpu_custom_call.1} parent=35 // pred_check
          %p252 = pneg %p63
        $region38: #{tpu_custom_call.1} parent=35 // pred_check_branch
          %254 = sbr.rel (%p252) target = $region40
        $region39: #{tpu_custom_call.1} parent=35 // pred_region
          %255 = dma.done %s248, 128
        $region40: #{tpu_custom_call.1} parent=35 // pred_fallthru
          _
        %s256 = sand.u32 %s50, 1
        %s257 = scalar_lea.sflag [#allocation3], %s256
        %s258 = sand.u32 %s50, 1
        %s259 = smul.addr %s258, 8
        %s260 = scalar_lea.vmem [#allocation2], %s259
        %p261 = pneg %p63
        %p262 = pneg %p60
        %p263 = scmp.lt.s32.totalorder %s26, 1
        %s264 = scalar_select %p263, %s26, 1
        %p265 = scmp.lt.s32.totalorder %s28, 0
        %s266 = scalar_select %p265, %s28, 0
        %s267 = smul.addr %s266, 2
        %s268 = smul.addr %s264, 2
        %s269 = sadd.s32 %s267, %s268
        %s270 = smul.addr %s269, 4
        %s271 = scalar_lea.vmem %s1, %s270
        %p272 = pneg %p91
        %p273 = pneg %p88
        %p274 = scmp.lt.s32.totalorder %s27, 0
        %s275 = scalar_select %p274, %s27, 0
        %s276 = smul.addr %s275, 4
        %s277 = scalar_lea.vmem %s2, %s276
        %p278 = pneg %p117
        %p279 = pneg %p114
        %p280 = scmp.lt.s32.totalorder %s27, 0
        %s281 = scalar_select %p280, %s27, 0
        %s282 = smul.addr %s281, 8
        %s283 = scalar_lea.vmem %s3, %s282
        %p284 = pneg %p143
        %p285 = pneg %p140
        %p286 = pneg %p173
        %p287 = pneg %p170
        %s288 = sand.u32 %s160, 1
        %s289 = scalar_lea.sflag [#allocation4], %s288
        %s290 = sand.u32 %s160, 1
        %s291 = smul.addr %s290, 8
        %s292 = scalar_lea.vmem [#allocation5], %s291
        %p293 = scmp.lt.s32.totalorder %s26, 1
        %s294 = scalar_select %p293, %s26, 1
        %p295 = scmp.lt.s32.totalorder %s28, 0
        %s296 = scalar_select %p295, %s28, 0
        %s297 = smul.addr %s296, 2
        %s298 = smul.addr %s294, 2
        %s299 = sadd.s32 %s297, %s298
        %s300 = smul.addr %s299, 4
        %s301 = scalar_lea.vmem %s1, %s300
        %p302 = scmp.lt.s32.totalorder %s27, 0
        %s303 = scalar_select %p302, %s27, 0
        %s304 = smul.addr %s303, 4
        %s305 = scalar_lea.vmem %s2, %s304
        %p306 = scmp.lt.s32.totalorder %s27, 0
        %s307 = scalar_select %p306, %s27, 0
        %s308 = smul.addr %s307, 8
        %s309 = scalar_lea.vmem %s3, %s308
        %v311 = vld [vmem:[%s251] sm:$0xf]
        %v312 = vld [vmem:[%s251 + $0x4] sm:$0xf]
        %v313 = vld [vmem:[%s301] sm:$0xf]
        %v314 = vld [vmem:[%s301 + $0x4] sm:$0xf]
        %v317 = vunpack.c.l.b16 %v311
        %v318 = vunpack.c.l.b16 %v312
        %v319 = vpack.c.b16 %v318, %v317
        %v323 = vunpack.c.l.b16 %v313
        %v324 = vunpack.c.l.b16 %v314
        %v325 = vpack.c.b16 %v324, %v323
        %326 = vrot.lane.b32.xlu0 %v319, 127
        %v327 = vpop.permute.xlu0 %326
        %328 = vrot.lane.b32.xlu0 %v325, 127
        %v329 = vpop.permute.xlu0 %328
        %vm330 = vcmask 1039360
        %v331 = vsel %vm330, %v327, %v329
        %333 = vrot.lane.b32.xlu0 %v319, 126
        %v334 = vpop.permute.xlu0 %333
        %335 = vrot.lane.b32.xlu0 %v325, 126
        %v336 = vpop.permute.xlu0 %335
        %vm337 = vcmask 1031168
        %v338 = vsel %vm337, %v334, %v336
        %v340 = vld [vmem:[%s305] sm:$0xf]
        %v341 = vld [vmem:[%s309] sm:$0xff]
        %343 = vset.pattern.permute.xlu0 0
        %344 = vperm.xlu0 %343, %v341
        %v345 = vpop.permute.xlu0 %344
        %vm347 = vcmask 392192
        %v349 = vsel %vm347, %v340, 0
        %351 = vmatprep.subr.bf16.mxu0 0
        %352 = vmatpush1.bf16.msra.mxu0 0
        %353 = vmatprep.subr.bf16.mxu0 0
        %354 = vmatpush1.bf16.msra.mxu0 0
        %355 = vmatprep.subr.bf16.mxu0 0
        %356 = vmatpush1.bf16.msra.mxu0 0
        %357 = vmatprep.subr.bf16.mxu0 0
        %358 = vmatpush1.bf16.msra.mxu0 0
        %359 = vmatprep.subr.bf16.mxu0 0
        %360 = vmatpush1.bf16.msra.mxu0 0
        %361 = vmatprep.subr.bf16.mxu0 0
        %362 = vmatpush1.bf16.msra.mxu0 %v338
        %363 = vmatprep.subr.bf16.mxu0 0
        %364 = vmatpush1.bf16.msra.mxu0 %v331
        %365 = vmatprep.subr.bf16.mxu0 0
        %366 = vmatpush1.bf16.msra.mxu0 %v319
        %367 = vmatprep.subr.bf16.mxu0 0
        %368 = vmatpush2.bf16.msra.mxu0 0
        %369 = vmatprep.subr.bf16.mxu0 0
        %370 = vmatpush2.bf16.msra.mxu0 0
        %371 = vmatprep.subr.bf16.mxu0 0
        %372 = vmatpush2.bf16.msra.mxu0 0
        %373 = vmatprep.subr.bf16.mxu0 0
        %374 = vmatpush2.bf16.msra.mxu0 0
        %375 = vmatprep.subr.bf16.mxu0 0
        %376 = vmatpush2.bf16.msra.mxu0 0
        %377 = vmatprep.subr.bf16.mxu0 0
        %378 = vmatpush2.bf16.msra.mxu0 0
        %379 = vmatprep.subr.bf16.mxu0 0
        %380 = vmatpush2.bf16.msra.mxu0 0
        %381 = vmatprep.subr.bf16.mxu0 0
        %382 = vmatpush2.bf16.msra.mxu0 0
        %383 = vmatprep.mubr.bf16.mxu0 0
        %384 = vmatmul.mubr.bf16.gmra.mxu0 %v349
        %v385 = vpop.f32.mrf.mxu0
        %v386 = vadd.f32 %v345, %v385
        %v387 = vpop.f32.mrf.mxu0
        %v388 = vpop.f32.mrf.mxu0
        %v389 = vpop.f32.mrf.mxu0
        %390 = vdwg.mxu0
        %391 = vst [vmem:[%s292] sm:$0xff] %v386
        %s392 = sand.u32 %s160, 1
        %s393 = scalar_lea.sflag [#allocation4], %s392
        %s394 = sand.u32 %s160, 1
        %s395 = smul.addr %s394, 8
        %s396 = scalar_lea.vmem [#allocation5], %s395
        // Predicated region
        $region41: #{tpu_custom_call.1} parent=35 // pred_check
          %p397 = pneg %p170
        $region42: #{tpu_custom_call.1} parent=35 // pred_check_branch
          %399 = sbr.rel (%p397) target = $region44
        $region43: #{tpu_custom_call.1} parent=35 // pred_region
          %s401 = ssub.s32 128, 128
          %402 = vsyncadd %s393, %s401
          %s403 = sadd.s32 %s28, %s27
          %s404 = sadd.s32 %s403, %s26
          %s405 = smul.addr %s404, 128
          %s406 = scalar_lea.hbm %s4, %s405
          %s408 = sshll.u32 %s396, 4
          %s409 = int_to_ptr.vmem [resolvable:$true] %s408
          %411 = dma.vmem_to_hbm [thread:$0]  %s409, 128, %s406, %s393
        $region44: #{tpu_custom_call.1} parent=35 // pred_fallthru
          _
      $region36: #{tpu_custom_call.1} parent=5 // pred_fallthru
        _
      %p412 = scmp.le.s32.totalorder 2, %s16
      // Predicated region
      $region45: #{tpu_custom_call.1} parent=5 // pred_check
        %p413 = pneg %p412
      $region46: #{tpu_custom_call.1} parent=5 // pred_check_branch
        %415 = sbr.rel (%p413) target = $region48
      $region47: #{tpu_custom_call.1} parent=5 // pred_region
        %s416 = ssub.s32 %s16, 2
        // Predicated region
        $region49: #{tpu_custom_call.1} parent=47 // pred_check
          %p417 = pneg %p176
        $region50: #{tpu_custom_call.1} parent=47 // pred_check_branch
          %419 = sbr.rel (%p417) target = $region52
        $region51: #{tpu_custom_call.1} parent=47 // pred_region
          %s420 = sand.u32 %s161, 1
          %s421 = scalar_lea.sflag [#allocation4], %s420
          %s422 = sand.u32 %s161, 1
          %s423 = smul.addr %s422, 8
          %s424 = scalar_lea.vmem [#allocation5], %s423
          %425 = dma.done %s421, 128
        $region52: #{tpu_custom_call.1} parent=47 // pred_fallthru
          _
      $region48: #{tpu_custom_call.1} parent=5 // pred_fallthru
        _
    $region6: #{tpu_custom_call.1} parent=1 // loop_footer
      %s20 = sadd.s32 1, %s16
    $region7: #{tpu_custom_call.1} parent=1 // loop_footer_branch
      %15 = sbr.rel target = $region3
    $region8: #{tpu_custom_call.1} parent=1 // loop_exit
      _
    %426 = vsyncpa [#allocation3], 1
    %s427 = scalar_lea.sflag [#allocation3], 1
    %428 = vsyncpa %s427, 1
    %429 = vsyncpa [#allocation4], 1
    %s430 = scalar_lea.sflag [#allocation4], 1
    %431 = vsyncpa %s430, 1

</llo_original>
